<compile_context>
chip_gen: v7x
topology: tpu7x:2x2x1
jax: 0.10.0
libtpu: 0.0.40
codegen_flags: <defaults>
</compile_context>

<pallas_src>
import jax
import jax.numpy as jnp
from jax.experimental import pallas as pl
from jax.experimental.pallas import tpu as pltpu


def _round_up(v, m):
    return (v + m - 1) // m * m


def dynamic_conv(x, weight, stride=1, *, block_s=512, block_n=None,
                 compute_dtype=None):
    """1-D dynamic conv.  x: (B, S, Din); weight: (Dout, Din, K) (PyTorch layout)."""
    B, S, Din = x.shape
    Dout, Din_w, K = weight.shape
    assert Din == Din_w, (Din, Din_w)
    assert stride == 1, "only stride=1 supported"
    pad = (K - 1) // 2
    S_out = (S + 2 * pad - K) // stride + 1
    out_dtype = x.dtype
    if compute_dtype is None:
        # bf16 is the MXU-native fast path on v6e/v7x; accumulation stays f32.
        compute_dtype = (jnp.bfloat16 if jnp.issubdtype(x.dtype, jnp.floating)
                         else x.dtype)

    LANE, SUB = 128, 8
    cbytes = jnp.dtype(compute_dtype).itemsize
    obytes = jnp.dtype(out_dtype).itemsize
    Dout_p = _round_up(Dout, LANE)                   # lane-dense output stores

    # ---- Dout tile: prefer a single resident weight slab (n_n == 1) --------
    if block_n is not None:
        TN = min(_round_up(block_n, LANE), Dout_p)
        if Dout_p % TN:
            TN = LANE
    elif 2 * K * Din * Dout_p * cbytes <= 8 * 1024 * 1024:
        TN = Dout_p                                  # weight fetched exactly once
    else:
        TN = 256 if Dout_p % 256 == 0 else LANE

    # ---- seq tile: as large as the VMEM budget allows ----------------------
    VMEM_BUDGET = 24 * 1024 * 1024                   # safe on v5e/v6e/v7x

    def vmem_est(ts, tn):
        wp = _round_up(ts + K - 1, SUB)
        # double-buffered window + weight (pipeline) + double-buffered out tile
        return 2 * (wp * Din + K * Din * tn) * cbytes + 2 * ts * tn * obytes

    def fit_ts(ts, tn):
        while ts > SUB and vmem_est(ts, tn) > VMEM_BUDGET:
            ts = max(SUB, _round_up(ts // 2, SUB))
        return ts

    TS0 = min(_round_up(block_s, SUB), _round_up(S_out, SUB))
    TS = fit_ts(TS0, TN)
    if vmem_est(TS, TN) > VMEM_BUDGET and TN > LANE:
        TN = LANE
        TS = fit_ts(TS0, TN)
    n_n = Dout_p // TN
    n_s = -(-S_out // TS)
    W = _round_up(TS + K - 1, SUB)                   # per-tile window rows

    # ---- wrapper-side layout plumbing (zero-padded, windowed view of x) ----
    x_c = x.astype(compute_dtype)
    S_pad = (n_s - 1) * TS + W                       # last tile's window end
    assert S_pad >= S + pad, (S_pad, S, pad)
    x_p = jnp.pad(x_c, ((0, 0), (pad, S_pad - S - pad), (0, 0)))
    idx = (jnp.arange(n_s) * TS)[:, None] + jnp.arange(W)[None, :]   # (n_s, W)
    x_win = jnp.take(x_p, idx, axis=1)               # (B, n_s, W, Din)

    # weight -> (K*Din, Dout_p) slab; row block k*Din:(k+1)*Din is tap k.
    w_slab = jnp.transpose(weight, (2, 1, 0)).reshape(K * Din, Dout)
    if Dout_p != Dout:
        w_slab = jnp.pad(w_slab, ((0, 0), (0, Dout_p - Dout)))
    w_slab = w_slab.astype(compute_dtype)

    # ---- kernel: K accumulating MXU matmuls, f32 accumulation --------------
    def kernel(xw_ref, w_ref, o_ref):
        acc = jnp.dot(xw_ref[0:TS, :], w_ref[0:Din, :],
                      preferred_element_type=jnp.float32)
        for k in range(1, K):
            acc += jnp.dot(xw_ref[k:k + TS, :],
                           w_ref[k * Din:(k + 1) * Din, :],
                           preferred_element_type=jnp.float32)
        o_ref[...] = acc.astype(o_ref.dtype)

    flops = 2 * B * S_out * K * Din * Dout_p
    bytes_accessed = (int(x_win.size) * cbytes * n_n
                      + int(w_slab.size) * cbytes
                      + B * S_out * Dout_p * obytes)

    out_p = pl.pallas_call(
        kernel,
        out_shape=jax.ShapeDtypeStruct((B, S_out, Dout_p), out_dtype),
        grid=(n_n, B, n_s),
        in_specs=[
            # Windowed activations: auto double-buffered by the pipeline.
            pl.BlockSpec((None, None, W, Din), lambda n, b, s: (b, s, 0, 0)),
            # Weight slab: block index constant in (b, s) -> fetched n_n times
            # total (once when n_n == 1) and kept resident.
            pl.BlockSpec((K * Din, TN), lambda n, b, s: (0, n)),
        ],
        out_specs=pl.BlockSpec((None, TS, TN), lambda n, b, s: (b, s, n)),
        compiler_params=pltpu.CompilerParams(
            # b / s are the axes worth sharding across v7x's two TensorCores.
            dimension_semantics=("arbitrary", "parallel", "parallel"),
            vmem_limit_bytes=32 * 1024 * 1024),
        cost_estimate=pl.CostEstimate(flops=flops, transcendentals=0,
                                      bytes_accessed=bytes_accessed),
    )(x_win, w_slab)

    return out_p if Dout_p == Dout else out_p[..., :Dout]


def dynamic_conv_ref(x, weight, stride=1):
    """Pure-JAX reference mirroring F.conv1d on permuted input."""
    K = weight.shape[-1]
    pad = (K - 1) // 2
    out = jax.lax.conv_general_dilated(
        jnp.transpose(x, (0, 2, 1)),          # (B, Din, S)   == NCH
        weight,                                # (Dout, Din, K) == OIH
        window_strides=(stride,),
        padding=[(pad, pad)],
        dimension_numbers=("NCH", "OIH", "NCH"),
    )
    return jnp.transpose(out, (0, 2, 1))       # (B, S_out, Dout)


if __name__ == "__main__":
    key = jax.random.PRNGKey(0)
    k1, k2, k3, k4, k5, k6 = jax.random.split(key, 6)

    # Toy shapes implied by the module: x (batch, seq_len, in_dim).
    batch, seq_len, in_dim, out_dim, ksize = 2, 8, 32, 32, 3
    x = jax.random.normal(k1, (batch, seq_len, in_dim), dtype=jnp.float32)
    dynamic_kernel = jax.random.normal(
        k2, (out_dim, in_dim, ksize), dtype=jnp.float32)

    ref = dynamic_conv_ref(x, dynamic_kernel)
    out = jax.block_until_ready(dynamic_conv(x, dynamic_kernel))   # bf16 compute default
    assert out.shape == ref.shape, (out.shape, ref.shape)
    assert out.dtype == ref.dtype, (out.dtype, ref.dtype)
    assert jnp.allclose(out, ref, atol=0.5, rtol=0.05), "default (bf16) path mismatch"

    # Explicit f32-operand path (tolerance stays loose: MXU may round operands).
    out_f32 = jax.block_until_ready(
        dynamic_conv(x, dynamic_kernel, compute_dtype=jnp.float32))
    assert jnp.allclose(out_f32, ref, atol=0.5, rtol=0.05), "f32 path mismatch"

    # Multi-seq-tile path with a partial last block (S_out % TS != 0, not a
    # multiple of 8) and padded Dout (160 -> 256 lanes).
    x2 = jax.random.normal(k3, (2, 250, 32), dtype=jnp.float32)
    w2 = jax.random.normal(k4, (160, 32, 3), dtype=jnp.float32)
    ref2 = dynamic_conv_ref(x2, w2)
    out2 = jax.block_until_ready(dynamic_conv(x2, w2, block_s=64))
    assert out2.shape == ref2.shape, (out2.shape, ref2.shape)
    assert jnp.allclose(out2, ref2, atol=0.5, rtol=0.05), "multi-tile mismatch"

    # Even kernel size (asymmetric effective padding, S_out = S - 1).
    x3 = jax.random.normal(k5, (2, 33, 24), dtype=jnp.float32)
    w3 = jax.random.normal(k6, (40, 24, 4), dtype=jnp.float32)
    ref3 = dynamic_conv_ref(x3, w3)
    out3 = jax.block_until_ready(dynamic_conv(x3, w3))
    assert out3.shape == ref3.shape, (out3.shape, ref3.shape)
    assert jnp.allclose(out3, ref3, atol=0.5, rtol=0.05), "even-K mismatch"

    print("KERNEL_OK")
</pallas_src>

<mosaic_0001>
module attributes {stable_mosaic.version = 11 : i64} {
  func.func @kernel(%arg0: i32, %arg1: i32, %arg2: i32, %arg3: memref<1x1x16x32xbf16, #tpu.memory_space<vmem>>, %arg4: memref<96x128xbf16, #tpu.memory_space<vmem>>, %arg5: memref<1x8x128xf32, #tpu.memory_space<vmem>>) attributes {dimension_semantics = [#tpu.dimension_semantics<arbitrary>, #tpu.dimension_semantics<parallel>, #tpu.dimension_semantics<parallel>], iteration_bounds = array<i64: 1, 2, 1>, scalar_prefetch = 0 : i64, scratch_operands = 0 : i64, tpu.core_type = #tpu.core_type<tc>, window_params = [{transform_indices = @transform_0, window_bounds = array<i64: 1, 1, 16, 32>}, {transform_indices = @transform_1, window_bounds = array<i64: 96, 128>}, {transform_indices = @transform_2, window_bounds = array<i64: 1, 8, 128>}]} {
    %c0 = arith.constant 0 : index
    %c0_0 = arith.constant 0 : index
    %c0_1 = arith.constant 0 : index
    %c0_2 = arith.constant 0 : index
    %0 = vector.load %arg3[%c0, %c0_0, %c0_1, %c0_2] : memref<1x1x16x32xbf16, #tpu.memory_space<vmem>>, vector<1x1x8x32xbf16>
    %1 = vector.shape_cast %0 : vector<1x1x8x32xbf16> to vector<8x32xbf16>
    %c0_3 = arith.constant 0 : index
    %c0_4 = arith.constant 0 : index
    %2 = vector.load %arg4[%c0_3, %c0_4] : memref<96x128xbf16, #tpu.memory_space<vmem>>, vector<32x128xbf16>
    %cst = arith.constant dense<0.000000e+00> : vector<8x128xf32>
    %3 = tpu.matmul %1, %2, %cst {dimension_numbers = #tpu.dot_dimension_numbers<[1], [0], [0], [1], [0, 0, 1, 1], [], []>} : vector<8x32xbf16>, vector<32x128xbf16>, vector<8x128xf32> -> vector<8x128xf32>
    %c0_5 = arith.constant 0 : index
    %c0_6 = arith.constant 0 : index
    %c1 = arith.constant 1 : index
    %c0_7 = arith.constant 0 : index
    %4 = vector.load %arg3[%c0_5, %c0_6, %c1, %c0_7] : memref<1x1x16x32xbf16, #tpu.memory_space<vmem>>, vector<1x1x8x32xbf16>
    %5 = vector.shape_cast %4 : vector<1x1x8x32xbf16> to vector<8x32xbf16>
    %c32 = arith.constant 32 : index
    %c0_8 = arith.constant 0 : index
    %6 = vector.load %arg4[%c32, %c0_8] : memref<96x128xbf16, #tpu.memory_space<vmem>>, vector<32x128xbf16>
    %cst_9 = arith.constant dense<0.000000e+00> : vector<8x128xf32>
    %7 = tpu.matmul %5, %6, %cst_9 {dimension_numbers = #tpu.dot_dimension_numbers<[1], [0], [0], [1], [0, 0, 1, 1], [], []>} : vector<8x32xbf16>, vector<32x128xbf16>, vector<8x128xf32> -> vector<8x128xf32>
    %8 = arith.addf %3, %7 : vector<8x128xf32>
    %c0_10 = arith.constant 0 : index
    %c0_11 = arith.constant 0 : index
    %c2 = arith.constant 2 : index
    %c0_12 = arith.constant 0 : index
    %9 = vector.load %arg3[%c0_10, %c0_11, %c2, %c0_12] : memref<1x1x16x32xbf16, #tpu.memory_space<vmem>>, vector<1x1x8x32xbf16>
    %10 = vector.shape_cast %9 : vector<1x1x8x32xbf16> to vector<8x32xbf16>
    %c64 = arith.constant 64 : index
    %c0_13 = arith.constant 0 : index
    %11 = vector.load %arg4[%c64, %c0_13] : memref<96x128xbf16, #tpu.memory_space<vmem>>, vector<32x128xbf16>
    %cst_14 = arith.constant dense<0.000000e+00> : vector<8x128xf32>
    %12 = tpu.matmul %10, %11, %cst_14 {dimension_numbers = #tpu.dot_dimension_numbers<[1], [0], [0], [1], [0, 0, 1, 1], [], []>} : vector<8x32xbf16>, vector<32x128xbf16>, vector<8x128xf32> -> vector<8x128xf32>
    %13 = arith.addf %8, %12 : vector<8x128xf32>
    %c0_15 = arith.constant 0 : index
    %c0_16 = arith.constant 0 : index
    %c0_17 = arith.constant 0 : index
    %14 = vector.load %arg5[%c0_15, %c0_16, %c0_17] : memref<1x8x128xf32, #tpu.memory_space<vmem>>, vector<1x8x128xf32>
    %15 = vector.shape_cast %14 : vector<1x8x128xf32> to vector<8x128xf32>
    %16 = vector.shape_cast %13 : vector<8x128xf32> to vector<1x8x128xf32>
    tpu.vector_store %arg5[%c0_15, %c0_16, %c0_17], %16 {strides = array<i32>} : memref<1x8x128xf32, #tpu.memory_space<vmem>>, vector<1x8x128xf32>,
    return
  }
  func.func @transform_0(%arg0: i32, %arg1: i32, %arg2: i32) -> (i32, i32, i32, i32) {
    %c0_i32 = arith.constant 0 : i32
    %c0_i32_0 = arith.constant 0 : i32
    %c0_i32_1 = arith.constant 0 : i32
    return %arg1, %arg2, %c0_i32, %c0_i32_0 : i32, i32, i32, i32
  }
  func.func @transform_1(%arg0: i32, %arg1: i32, %arg2: i32) -> (i32, i32) {
    %c0_i32 = arith.constant 0 : i32
    %c0_i32_0 = arith.constant 0 : i32
    return %c0_i32, %arg0 : i32, i32
  }
  func.func @transform_2(%arg0: i32, %arg1: i32, %arg2: i32) -> (i32, i32, i32) {
    %c0_i32 = arith.constant 0 : i32
    return %arg1, %arg2, %arg0 : i32, i32, i32
  }
}

</mosaic_0001>

<llo_original>
// kernel: tpu_custom_call.1
$region0: #{tpu_custom_call.1}
  #allocation0 [shape = 'u32[]', space=smem, size = 0x4, offset = 0x4, fixed_abs, tag = 'smem constant byte address 0x4 - core index']
  #allocation1 [shape = 'u32[144,128]{1,0:T(1,128)}', space=vmem, size = 0x12000, scoped, tag = 'internal scratch']
  %s0 = inlined_call_operand.hbm [shape: bf16[2,1,16,32], index: 0, kind: input, shape index: {}]
  %s1 = inlined_call_operand.hbm [shape: bf16[96,128], index: 1, kind: input, shape index: {}]
  %s2 = inlined_call_operand.hbm [shape: f32[2,8,128], index: 2, kind: output, shape index: {}]
  %s3 = sld [smem:[#allocation0]]
  $region49: #{tpu_custom_call.1} parent=0
    _
  %s5 = ssub.s32 1, %s3
  %s6 = scalar_select 0, %s5, %s3
  $region1: #{tpu_custom_call.1} parent=0
    #allocation2 [shape = 'u8[8192]{0}', space=vmem, size = 0x2000, scoped, tag = 'input window, operand 0']
    #allocation3 [shape = 's32[2]{0}', space=sflag, size = 0x8, scoped, tag = 'scoped memory for tpu_custom_call.1']
    #allocation4 [shape = 's32[2]{0}', space=sflag, size = 0x8, scoped, tag = 'scoped memory for tpu_custom_call.1']
    #allocation5 [shape = 'u8[24576]{0}', space=vmem, size = 0x6000, scoped, tag = 'input window, operand 1, single buffered']
    #allocation6 [shape = 's32[1]{0}', space=sflag, size = 0x4, scoped, tag = 'scoped memory for tpu_custom_call.1']
    #allocation7 [shape = 'u8[8192]{0}', space=vmem, size = 0x2000, scoped, tag = 'output window, operand 0']
    %7 = vsyncpa [#allocation3], 0
    %s8 = scalar_lea.sflag [#allocation3], 1
    %9 = vsyncpa %s8, 0
    %10 = vsyncpa [#allocation6], 0
    %11 = vsyncpa [#allocation4], 0
    %s12 = scalar_lea.sflag [#allocation4], 1
    %13 = vsyncpa %s12, 0
    loop: start=0, step=1, limit=4
    $region2: #{tpu_custom_call.1} parent=1 // loop_pre_header
      _
    $region3: #{tpu_custom_call.1} parent=1 // loop_header
      %s15 = sphi 0, %s19
      %p16 = scmp.ge.s32.totalorder %s15, 4
      %s22 = sphi 0, %s41
      %s23 = sphi 0, %s37
      %s24 = sphi 0, %s33
      %s25 = sphi 0, %s22
      %s26 = sphi 0, %s23
      %s27 = sphi 0, %s24
      %s28 = sphi 0, %s25
      %s29 = sphi 0, %s26
      %s30 = sphi 0, %s27
      %s46 = sphi 0, %s48
      %s49 = sphi 0, %s46
      %s50 = sphi 0, %s49
      %s66 = sphi 0, %s50
      %s72 = sphi 0, %s74
      %s75 = sphi 0, %s72
      %s76 = sphi 0, %s75
      %s92 = sphi 0, %s76
      %s102 = sphi 0, %s104
      %s105 = sphi 0, %s102
      %s106 = sphi 0, %s105
      %s122 = sphi 0, %s106
    $region4: #{tpu_custom_call.1} parent=1 // loop_header_branch
      %18 = sbr.rel (%p16) target = $region8
    $region5: #{tpu_custom_call.1} parent=1 // loop_body
      %s20 = ssub.s32 %s15, 1
      %s21 = ssub.s32 %s15, 2
      %s31 = sadd.s32 1, %s24
      %p32 = scmp.ge.s32.totalorder %s31, 1
      %s33 = scalar_select %p32, 0, %s31
      %s34 = sadd.s32 1, %s23
      %s35 = scalar_select %p32, %s34, %s23
      %p36 = scmp.ge.s32.totalorder %s35, 2
      %s37 = scalar_select %p36, 0, %s35
      %s38 = sadd.s32 1, %s22
      %s39 = scalar_select %p36, %s38, %s22
      %p40 = scmp.ge.s32.totalorder %s39, 1
      %s41 = scalar_select %p40, 0, %s39
      %s42 = ssub.s32 %s23, %s37
      %s43 = ssub.s32 %s24, %s33
      %s44 = sor.u32 %s42, %s43
      %p45 = scmp.eq.s32.totalorder %s44, 0
      %s47 = sadd.s32 %s46, 1
      %s48 = scalar_select %p45, %s46, %s47
      %p51 = pneg %p45
      %p52 = scmp.eq.s32.totalorder %s15, 1
      %p53 = por %p51, %p52
      %p54 = scmp.ne.s32.totalorder %s46, %s49
      %p55 = scmp.eq.s32.totalorder %s15, 0
      %p56 = por %p54, %p55
      %p57 = scmp.ne.s32.totalorder %s46, %s49
      %p58 = scmp.eq.s32.totalorder %s20, 1
      %p59 = por %p57, %p58
      %p60 = scmp.ne.s32.totalorder %s49, %s50
      %p61 = scmp.eq.s32.totalorder %s20, 0
      %p62 = por %p60, %p61
      %p63 = scmp.ne.s32.totalorder %s49, %s50
      %p64 = scmp.eq.s32.totalorder %s21, 1
      %p65 = por %p63, %p64
      %p67 = scmp.ne.s32.totalorder %s50, %s66
      %p68 = scmp.eq.s32.totalorder %s21, 0
      %p69 = por %p67, %p68
      %s70 = ssub.s32 %s22, %s41
      %p71 = scmp.eq.s32.totalorder %s70, 0
      %s73 = sadd.s32 %s72, 1
      %s74 = scalar_select %p71, %s72, %s73
      %p77 = pneg %p71
      %p78 = scmp.eq.s32.totalorder %s15, 1
      %p79 = por %p77, %p78
      %p80 = scmp.ne.s32.totalorder %s72, %s75
      %p81 = scmp.eq.s32.totalorder %s15, 0
      %p82 = por %p80, %p81
      %p83 = scmp.ne.s32.totalorder %s72, %s75
      %p84 = scmp.eq.s32.totalorder %s20, 1
      %p85 = por %p83, %p84
      %p86 = scmp.ne.s32.totalorder %s75, %s76
      %p87 = scmp.eq.s32.totalorder %s20, 0
      %p88 = por %p86, %p87
      %p89 = scmp.ne.s32.totalorder %s75, %s76
      %p90 = scmp.eq.s32.totalorder %s21, 1
      %p91 = por %p89, %p90
      %p93 = scmp.ne.s32.totalorder %s76, %s92
      %p94 = scmp.eq.s32.totalorder %s21, 0
      %p95 = por %p93, %p94
      %s96 = ssub.s32 %s23, %s37
      %s97 = ssub.s32 %s24, %s33
      %s98 = sor.u32 %s96, %s97
      %s99 = ssub.s32 %s22, %s41
      %s100 = sor.u32 %s98, %s99
      %p101 = scmp.eq.s32.totalorder %s100, 0
      %s103 = sadd.s32 %s102, 1
      %s104 = scalar_select %p101, %s102, %s103
      %p107 = pneg %p101
      %p108 = scmp.eq.s32.totalorder %s15, 1
      %p109 = por %p107, %p108
      %p110 = scmp.ne.s32.totalorder %s102, %s105
      %p111 = scmp.eq.s32.totalorder %s15, 0
      %p112 = por %p110, %p111
      %p113 = scmp.ne.s32.totalorder %s102, %s105
      %p114 = scmp.eq.s32.totalorder %s20, 1
      %p115 = por %p113, %p114
      %p116 = scmp.ne.s32.totalorder %s105, %s106
      %p117 = scmp.eq.s32.totalorder %s20, 0
      %p118 = por %p116, %p117
      %p119 = scmp.ne.s32.totalorder %s105, %s106
      %p120 = scmp.eq.s32.totalorder %s21, 1
      %p121 = por %p119, %p120
      %p123 = scmp.ne.s32.totalorder %s106, %s122
      %p124 = scmp.eq.s32.totalorder %s21, 0
      %p125 = por %p123, %p124
      %p126 = scmp.le.s32.totalorder 1, %s15
      %p127 = scmp.lt.s32.totalorder %s15, 3
      %p128 = pnand %p126, %p127
      %p129 = pneg %p128
      // Predicated region
      $region9: #{tpu_custom_call.1} parent=5 // pred_check
        _
      $region10: #{tpu_custom_call.1} parent=5 // pred_check_branch
        %131 = sbr.rel (%p128) target = $region12
      $region11: #{tpu_custom_call.1} parent=5 // pred_region
        %s132 = ssub.s32 %s15, 1
        // Predicated region
        $region13: #{tpu_custom_call.1} parent=11 // pred_check
          %p133 = pneg %p88
        $region14: #{tpu_custom_call.1} parent=11 // pred_check_branch
          %135 = sbr.rel (%p133) target = $region16
        $region15: #{tpu_custom_call.1} parent=11 // pred_region
          %s137 = ssub.s32 768, 768
          %138 = vsyncadd [#allocation6], %s137
          %s139 = smul.addr %s25, 64
          %s140 = scalar_lea.hbm %s1, %s139
          %s141 = sshll.u32 [#allocation5], 4
          %s142 = int_to_ptr.vmem [resolvable:$true] %s141
          %147 = dma.hbm_to_vmem [thread:$0]  %s140, 768, %s142, [#allocation6], 64, 64, 4
        $region16: #{tpu_custom_call.1} parent=11 // pred_fallthru
          _
      $region12: #{tpu_custom_call.1} parent=5 // pred_fallthru
        _
      %p148 = scmp.lt.s32.totalorder %s15, 2
      // Predicated region
      $region17: #{tpu_custom_call.1} parent=5 // pred_check
        %p149 = pneg %p148
      $region18: #{tpu_custom_call.1} parent=5 // pred_check_branch
        %151 = sbr.rel (%p149) target = $region20
      $region19: #{tpu_custom_call.1} parent=5 // pred_region
        // Predicated region
        $region21: #{tpu_custom_call.1} parent=19 // pred_check
          %p152 = pneg %p56
        $region22: #{tpu_custom_call.1} parent=19 // pred_check_branch
          %154 = sbr.rel (%p152) target = $region24
        $region23: #{tpu_custom_call.1} parent=19 // pred_region
          %s155 = sand.u32 %s46, 1
          %s156 = scalar_lea.sflag [#allocation3], %s155
          %s157 = sand.u32 %s46, 1
          %s158 = smul.addr %s157, 8
          %s159 = scalar_lea.vmem [#allocation2], %s158
          %s161 = ssub.s32 128, 128
          %162 = vsyncadd %s156, %s161
          %s163 = smul.addr %s24, 2
          %s164 = smul.addr %s23, 2
          %s165 = sadd.s32 %s163, %s164
          %s166 = smul.addr %s165, 64
          %s167 = scalar_lea.hbm %s0, %s166
          %s168 = sshll.u32 %s159, 4
          %s169 = int_to_ptr.vmem [resolvable:$true] %s168
          %174 = dma.hbm_to_vmem [thread:$0]  %s167, 128, %s169, %s156, 64, 64, 4
        $region24: #{tpu_custom_call.1} parent=19 // pred_fallthru
          _
      $region20: #{tpu_custom_call.1} parent=5 // pred_fallthru
        _
      %p175 = scmp.le.s32.totalorder 1, %s15
      %p176 = scmp.lt.s32.totalorder %s15, 3
      %p177 = pnand %p175, %p176
      %p178 = pneg %p177
      // Predicated region
      $region25: #{tpu_custom_call.1} parent=5 // pred_check
        _
      $region26: #{tpu_custom_call.1} parent=5 // pred_check_branch
        %180 = sbr.rel (%p177) target = $region28
      $region27: #{tpu_custom_call.1} parent=5 // pred_region
        %s181 = ssub.s32 %s15, 1
        %s182 = sand.u32 %s49, 1
        %s183 = scalar_lea.sflag [#allocation3], %s182
        %s184 = sand.u32 %s49, 1
        %s185 = smul.addr %s184, 8
        %s186 = scalar_lea.vmem [#allocation2], %s185
        // Predicated region
        $region29: #{tpu_custom_call.1} parent=27 // pred_check
          %p187 = pneg %p62
        $region30: #{tpu_custom_call.1} parent=27 // pred_check_branch
          %189 = sbr.rel (%p187) target = $region32
        $region31: #{tpu_custom_call.1} parent=27 // pred_region
          %190 = dma.done %s183, 128
        $region32: #{tpu_custom_call.1} parent=27 // pred_fallthru
          _
        // Predicated region
        $region33: #{tpu_custom_call.1} parent=27 // pred_check
          %p191 = pneg %p88
        $region34: #{tpu_custom_call.1} parent=27 // pred_check_branch
          %193 = sbr.rel (%p191) target = $region36
        $region35: #{tpu_custom_call.1} parent=27 // pred_region
          %194 = dma.done [#allocation6], 768
        $region36: #{tpu_custom_call.1} parent=27 // pred_fallthru
          _
        %s195 = sand.u32 %s49, 1
        %s196 = scalar_lea.sflag [#allocation3], %s195
        %s197 = sand.u32 %s49, 1
        %s198 = smul.addr %s197, 8
        %s199 = scalar_lea.vmem [#allocation2], %s198
        %p200 = pneg %p62
        %p201 = pneg %p59
        %p202 = pneg %p88
        %p203 = pneg %p85
        %p204 = pneg %p118
        %p205 = pneg %p115
        %s206 = sand.u32 %s105, 1
        %s207 = scalar_lea.sflag [#allocation4], %s206
        %s208 = sand.u32 %s105, 1
        %s209 = smul.addr %s208, 8
        %s210 = scalar_lea.vmem [#allocation7], %s209
        %v212 = vld [vmem:[%s186] sm:$0xf]
        %v213 = vld [vmem:[#allocation5] sm:$0xf]
        %v214 = vld [vmem:[#allocation5 + $0x4] sm:$0xf]
        %v215 = vld [vmem:[#allocation5 + $0x8] sm:$0xf]
        %v216 = vld [vmem:[#allocation5 + $0xc] sm:$0xf]
        %v217 = vld [vmem:[%s186 + $0x4] sm:$0x1]
        %v218 = vld [vmem:[#allocation5 + $0x10] sm:$0xf]
        %v219 = vld [vmem:[#allocation5 + $0x14] sm:$0xf]
        %v220 = vld [vmem:[#allocation5 + $0x18] sm:$0xf]
        %v221 = vld [vmem:[#allocation5 + $0x1c] sm:$0xf]
        %v224 = vunpack.c.l.b16 %v212
        %v225 = vunpack.c.l.b16 %v217
        %v226 = vpack.c.b16 %v225, %v224
        %v228 = vshrl.u32 %v226, 16
        %v230 = vshll.u32 %v226, 16
        %v232 = vrot.slane %v230, 1
        %v233 = vor.u32 %v228, %v232
        %v238 = vunpack.c.l.b16 %v218
        %v239 = vunpack.c.l.b16 %v219
        %v240 = vunpack.c.l.b16 %v220
        %v241 = vunpack.c.l.b16 %v221
        %v242 = vpack.c.b16 %v239, %v238
        %v243 = vpack.c.b16 %v241, %v240
        %vm246 = vcmask 261120
        %v248 = vsel %vm246, %v233, 0
        %250 = vmatprep.subr.bf16.mxu0 0
        %251 = vmatpush1.bf16.msra.mxu0 %v242
        %252 = vmatprep.subr.bf16.mxu0 0
        %253 = vmatpush1.bf16.msra.mxu0 %v243
        %254 = vmatprep.subr.bf16.mxu0 0
        %255 = vmatpush1.bf16.msra.mxu0 0
        %256 = vmatprep.subr.bf16.mxu0 0
        %257 = vmatpush1.bf16.msra.mxu0 0
        %258 = vmatprep.subr.bf16.mxu0 0
        %259 = vmatpush1.bf16.msra.mxu0 0
        %260 = vmatprep.subr.bf16.mxu0 0
        %261 = vmatpush1.bf16.msra.mxu0 0
        %262 = vmatprep.subr.bf16.mxu0 0
        %263 = vmatpush1.bf16.msra.mxu0 0
        %264 = vmatprep.subr.bf16.mxu0 0
        %265 = vmatpush1.bf16.msra.mxu0 0
        %266 = vmatprep.subr.bf16.mxu0 0
        %267 = vmatpush1.bf16.msra.mxu0 0
        %268 = vmatprep.subr.bf16.mxu0 0
        %269 = vmatpush1.bf16.msra.mxu0 0
        %270 = vmatprep.subr.bf16.mxu0 0
        %271 = vmatpush1.bf16.msra.mxu0 0
        %272 = vmatprep.subr.bf16.mxu0 0
        %273 = vmatpush1.bf16.msra.mxu0 0
        %274 = vmatprep.subr.bf16.mxu0 0
        %275 = vmatpush1.bf16.msra.mxu0 0
        %276 = vmatprep.subr.bf16.mxu0 0
        %277 = vmatpush1.bf16.msra.mxu0 0
        %278 = vmatprep.subr.bf16.mxu0 0
        %279 = vmatpush1.bf16.msra.mxu0 0
        %280 = vmatprep.subr.bf16.mxu0 0
        %281 = vmatpush1.bf16.msra.mxu0 0
        %282 = vmatprep.mubr.bf16.mxu0 0
        %283 = vmatmul.mubr.bf16.gmra.mrb[0].mxu0 %v248
        %v284 = vpop.f32.mrb[0].mxu0
        %v285 = vadd.f32 0.0, %v284
        %v286 = vpop.f32.mrb[0].mxu0
        %v287 = vpop.f32.mrb[0].mxu0
        %v288 = vpop.f32.mrb[0].mxu0
        %289 = vdwg.mxu0
        %v294 = vunpack.c.l.b16 %v213
        %v295 = vunpack.c.l.b16 %v214
        %v296 = vunpack.c.l.b16 %v215
        %v297 = vunpack.c.l.b16 %v216
        %v298 = vpack.c.b16 %v295, %v294
        %v299 = vpack.c.b16 %v297, %v296
        %v303 = vsel %vm246, %v212, 0
        %305 = vmatprep.subr.bf16.mxu0 0
        %306 = vmatpush1.bf16.msra.mxu0 %v298
        %307 = vmatprep.subr.bf16.mxu0 0
        %308 = vmatpush1.bf16.msra.mxu0 %v299
        %309 = vmatprep.subr.bf16.mxu0 0
        %310 = vmatpush1.bf16.msra.mxu0 0
        %311 = vmatprep.subr.bf16.mxu0 0
        %312 = vmatpush1.bf16.msra.mxu0 0
        %313 = vmatprep.subr.bf16.mxu0 0
        %314 = vmatpush1.bf16.msra.mxu0 0
        %315 = vmatprep.subr.bf16.mxu0 0
        %316 = vmatpush1.bf16.msra.mxu0 0
        %317 = vmatprep.subr.bf16.mxu0 0
        %318 = vmatpush1.bf16.msra.mxu0 0
        %319 = vmatprep.subr.bf16.mxu0 0
        %320 = vmatpush1.bf16.msra.mxu0 0
        %321 = vmatprep.subr.bf16.mxu0 0
        %322 = vmatpush1.bf16.msra.mxu0 0
        %323 = vmatprep.subr.bf16.mxu0 0
        %324 = vmatpush1.bf16.msra.mxu0 0
        %325 = vmatprep.subr.bf16.mxu0 0
        %326 = vmatpush1.bf16.msra.mxu0 0
        %327 = vmatprep.subr.bf16.mxu0 0
        %328 = vmatpush1.bf16.msra.mxu0 0
        %329 = vmatprep.subr.bf16.mxu0 0
        %330 = vmatpush1.bf16.msra.mxu0 0
        %331 = vmatprep.subr.bf16.mxu0 0
        %332 = vmatpush1.bf16.msra.mxu0 0
        %333 = vmatprep.subr.bf16.mxu0 0
        %334 = vmatpush1.bf16.msra.mxu0 0
        %335 = vmatprep.subr.bf16.mxu0 0
        %336 = vmatpush1.bf16.msra.mxu0 0
        %337 = vmatprep.mubr.bf16.mxu0 0
        %338 = vmatmul.mubr.bf16.gmra.mrb[0].mxu0 %v303
        %v339 = vpop.f32.mrb[0].mxu0
        %v340 = vadd.f32 %v285, %v339
        %v341 = vpop.f32.mrb[0].mxu0
        %v342 = vpop.f32.mrb[0].mxu0
        %v343 = vpop.f32.mrb[0].mxu0
        %344 = vdwg.mxu0
        %v345 = vld [vmem:[%s186] sm:$0xe]
        %v346 = vld [vmem:[#allocation5 + $0x20] sm:$0xf]
        %v347 = vld [vmem:[#allocation5 + $0x24] sm:$0xf]
        %v348 = vld [vmem:[#allocation5 + $0x28] sm:$0xf]
        %v349 = vld [vmem:[#allocation5 + $0x2c] sm:$0xf]
        %v351 = vunpack.c.l.b16 %v345
        %v352 = vpack.c.b16 %v225, %v351
        %v353 = vrot.slane %v352, 1
        %v358 = vunpack.c.l.b16 %v346
        %v359 = vunpack.c.l.b16 %v347
        %v360 = vunpack.c.l.b16 %v348
        %v361 = vunpack.c.l.b16 %v349
        %v362 = vpack.c.b16 %v359, %v358
        %v363 = vpack.c.b16 %v361, %v360
        %v367 = vsel %vm246, %v353, 0
        %369 = vmatprep.subr.bf16.mxu0 0
        %370 = vmatpush1.bf16.msra.mxu0 %v362
        %371 = vmatprep.subr.bf16.mxu0 0
        %372 = vmatpush1.bf16.msra.mxu0 %v363
        %373 = vmatprep.subr.bf16.mxu0 0
        %374 = vmatpush1.bf16.msra.mxu0 0
        %375 = vmatprep.subr.bf16.mxu0 0
        %376 = vmatpush1.bf16.msra.mxu0 0
        %377 = vmatprep.subr.bf16.mxu0 0
        %378 = vmatpush1.bf16.msra.mxu0 0
        %379 = vmatprep.subr.bf16.mxu0 0
        %380 = vmatpush1.bf16.msra.mxu0 0
        %381 = vmatprep.subr.bf16.mxu0 0
        %382 = vmatpush1.bf16.msra.mxu0 0
        %383 = vmatprep.subr.bf16.mxu0 0
        %384 = vmatpush1.bf16.msra.mxu0 0
        %385 = vmatprep.subr.bf16.mxu0 0
        %386 = vmatpush1.bf16.msra.mxu0 0
        %387 = vmatprep.subr.bf16.mxu0 0
        %388 = vmatpush1.bf16.msra.mxu0 0
        %389 = vmatprep.subr.bf16.mxu0 0
        %390 = vmatpush1.bf16.msra.mxu0 0
        %391 = vmatprep.subr.bf16.mxu0 0
        %392 = vmatpush1.bf16.msra.mxu0 0
        %393 = vmatprep.subr.bf16.mxu0 0
        %394 = vmatpush1.bf16.msra.mxu0 0
        %395 = vmatprep.subr.bf16.mxu0 0
        %396 = vmatpush1.bf16.msra.mxu0 0
        %397 = vmatprep.subr.bf16.mxu0 0
        %398 = vmatpush1.bf16.msra.mxu0 0
        %399 = vmatprep.subr.bf16.mxu0 0
        %400 = vmatpush1.bf16.msra.mxu0 0
        %401 = vmatprep.mubr.bf16.mxu0 0
        %402 = vmatmul.mubr.bf16.gmra.mrb[0].mxu0 %v367
        %v403 = vpop.f32.mrb[0].mxu0
        %v404 = vadd.f32 0.0, %v403
        %v405 = vpop.f32.mrb[0].mxu0
        %v406 = vpop.f32.mrb[0].mxu0
        %v407 = vpop.f32.mrb[0].mxu0
        %408 = vdwg.mxu0
        %v409 = vadd.f32 %v340, %v404
        %410 = vst [vmem:[%s210] sm:$0xff] %v409
        %s411 = sand.u32 %s105, 1
        %s412 = scalar_lea.sflag [#allocation4], %s411
        %s413 = sand.u32 %s105, 1
        %s414 = smul.addr %s413, 8
        %s415 = scalar_lea.vmem [#allocation7], %s414
        // Predicated region
        $region37: #{tpu_custom_call.1} parent=27 // pred_check
          %p416 = pneg %p115
        $region38: #{tpu_custom_call.1} parent=27 // pred_check_branch
          %418 = sbr.rel (%p416) target = $region40
        $region39: #{tpu_custom_call.1} parent=27 // pred_region
          %s420 = ssub.s32 128, 128
          %421 = vsyncadd %s412, %s420
          %s422 = sadd.s32 %s25, %s27
          %s423 = sadd.s32 %s422, %s26
          %s424 = smul.addr %s423, 128
          %s425 = scalar_lea.hbm %s2, %s424
          %s427 = sshll.u32 %s415, 4
          %s428 = int_to_ptr.vmem [resolvable:$true] %s427
          %430 = dma.vmem_to_hbm [thread:$0]  %s428, 128, %s425, %s412
        $region40: #{tpu_custom_call.1} parent=27 // pred_fallthru
          _
      $region28: #{tpu_custom_call.1} parent=5 // pred_fallthru
        _
      %p431 = scmp.le.s32.totalorder 2, %s15
      // Predicated region
      $region41: #{tpu_custom_call.1} parent=5 // pred_check
        %p432 = pneg %p431
      $region42: #{tpu_custom_call.1} parent=5 // pred_check_branch
        %434 = sbr.rel (%p432) target = $region44
      $region43: #{tpu_custom_call.1} parent=5 // pred_region
        %s435 = ssub.s32 %s15, 2
        // Predicated region
        $region45: #{tpu_custom_call.1} parent=43 // pred_check
          %p436 = pneg %p121
        $region46: #{tpu_custom_call.1} parent=43 // pred_check_branch
          %438 = sbr.rel (%p436) target = $region48
        $region47: #{tpu_custom_call.1} parent=43 // pred_region
          %s439 = sand.u32 %s106, 1
          %s440 = scalar_lea.sflag [#allocation4], %s439
          %s441 = sand.u32 %s106, 1
          %s442 = smul.addr %s441, 8
          %s443 = scalar_lea.vmem [#allocation7], %s442
          %444 = dma.done %s440, 128
        $region48: #{tpu_custom_call.1} parent=43 // pred_fallthru
          _
      $region44: #{tpu_custom_call.1} parent=5 // pred_fallthru
        _
    $region6: #{tpu_custom_call.1} parent=1 // loop_footer
      %s19 = sadd.s32 1, %s15
    $region7: #{tpu_custom_call.1} parent=1 // loop_footer_branch
      %14 = sbr.rel target = $region3
    $region8: #{tpu_custom_call.1} parent=1 // loop_exit
      _
    %445 = vsyncpa [#allocation3], 1
    %s446 = scalar_lea.sflag [#allocation3], 1
    %447 = vsyncpa %s446, 1
    %448 = vsyncpa [#allocation6], 1
    %449 = vsyncpa [#allocation4], 1
    %s450 = scalar_lea.sflag [#allocation4], 1
    %451 = vsyncpa %s450, 1

</llo_original>
